<compile_context>
chip_gen: v5e
topology: v5e:2x2
jax: 0.10.0
libtpu: 0.0.40
codegen_flags: <defaults>
</compile_context>

<pallas_src>
import jax
import jax.numpy as jnp
from jax.experimental import pallas as pl
from jax.experimental.pallas import tpu as pltpu


def _round_up(x: int, m: int) -> int:
    return ((x + m - 1) // m) * m


def _cdiv(a: int, b: int) -> int:
    return (a + b - 1) // b


def _pick_batch_tiling(batch: int):
    """Pick (tile_rows, padded_batch, steps) for the batch grid axis.

    - tile sized to the batch (minimal zero-row padding, <= 8 pad rows/tile)
    - >= 2 steps once batch >= 256 so v7x megacore gets both TensorCores
    - tile capped at 512 rows: f32 h1/h2 intermediates + bf16 input double
      buffers stay ~2-3 MB, well under v5e's 16 MiB default scoped VMEM.
    """
    bt_max = 512
    steps = max(1, _cdiv(batch, bt_max))
    if batch >= 256:
        steps = max(steps, 2)
    if steps > 1:
        steps = 2 * _cdiv(steps, 2)          # even step count shards cleanly on 2 TCs
    bt = _round_up(_cdiv(batch, steps), 8)
    bp = bt * steps
    return bt, bp, steps


def _critic_kernel(x_ref, w1_ref, b1_ref, w2_ref, b2_ref, w3_ref, b3_ref, o_ref):
    # h1 = relu([state|action] @ W1 + b1)   -- single K=(state+action) matmul
    h1 = jnp.dot(x_ref[...], w1_ref[...],
                 preferred_element_type=jnp.float32) + b1_ref[...]
    h1 = jnp.maximum(h1, 0.0)

    # h2 = relu(h1 @ W2 + b2)
    h2 = jnp.dot(h1.astype(jnp.bfloat16), w2_ref[...],
                 preferred_element_type=jnp.float32) + b2_ref[...]
    h2 = jnp.maximum(h2, 0.0)

    # q = h2 @ W3 + b3 with out_dim == 1 -> VPU multiply + XLU lane reduction
    # (avoids an MXU matmul / 128-wide padded weight for one output column).
    q = jnp.sum(h2 * w3_ref[...], axis=-1, keepdims=True) + b3_ref[...]
    o_ref[...] = q


@jax.jit
def critic_forward(state, action, prep):
    """Pallas implementation of Critic.forward(state, action).

    `prep` is the output of prepare_critic_params (weights already merged,
    transposed and cast once), so the only per-call glue is the concat + cast
    + batch padding of the activations.
    """
    batch = state.shape[0]
    in_dim, h1_dim = prep["w1"].shape
    h2_dim = prep["w2"].shape[1]

    bt, bp, _ = _pick_batch_tiling(batch)

    # Concatenate once in the wrapper (mirrors torch.cat) and feed bf16 to the
    # MXU directly -- no in-kernel cast, half the input HBM/VMEM traffic.
    x = jnp.concatenate([state, action], axis=1).astype(jnp.bfloat16)
    if bp != batch:
        x = jnp.pad(x, ((0, bp - batch), (0, 0)))

    flops = 2 * bp * (in_dim * h1_dim + h1_dim * h2_dim + h2_dim)
    bytes_accessed = (
        x.size * 2 + bp * 4
        + (prep["w1"].size + prep["w2"].size) * 2
        + (prep["b1"].size + prep["b2"].size + prep["w3"].size + prep["b3"].size) * 4)

    wspec = lambda shape: pl.BlockSpec(shape, lambda i: (0, 0))  # resident weights

    q_p = pl.pallas_call(
        _critic_kernel,
        out_shape=jax.ShapeDtypeStruct((bp, 1), jnp.float32),
        grid=(bp // bt,),
        in_specs=[
            pl.BlockSpec((bt, in_dim), lambda i: (i, 0)),
            wspec((in_dim, h1_dim)),
            wspec((1, h1_dim)),
            wspec((h1_dim, h2_dim)),
            wspec((1, h2_dim)),
            wspec((1, h2_dim)),
            wspec((1, 1)),
        ],
        out_specs=pl.BlockSpec((bt, 1), lambda i: (i, 0)),
        compiler_params=pltpu.CompilerParams(
            dimension_semantics=("parallel",)),
        cost_estimate=pl.CostEstimate(
            flops=flops, transcendentals=0, bytes_accessed=bytes_accessed),
    )(x, prep["w1"], prep["b1"], prep["w2"], prep["b2"], prep["w3"], prep["b3"])

    return q_p[:batch]


def init_critic_params(key, state_dim, action_dim):
    """Deterministic init mirroring nn.Linear (weights stored as (in, out))."""
    dims = [(state_dim + action_dim, 400), (400, 300), (300, 1)]
    keys = jax.random.split(key, 2 * len(dims))
    params = {}
    for i, (din, dout) in enumerate(dims):
        bound = 1.0 / jnp.sqrt(din)  # PyTorch Linear default U(-1/sqrt(in), 1/sqrt(in))
        params[f"w{i + 1}"] = jax.random.uniform(
            keys[2 * i], (din, dout), jnp.float32, -bound, bound)
        params[f"b{i + 1}"] = jax.random.uniform(
            keys[2 * i + 1], (dout,), jnp.float32, -bound, bound)
    return params


def prepare_critic_params(params):
    """One-time layout/dtype prep (hoisted out of the per-call jit)."""
    return {
        "w1": jnp.asarray(params["w1"], jnp.bfloat16),                # (state+action, 400)
        "b1": jnp.asarray(params["b1"], jnp.float32).reshape(1, -1),  # (1, 400)
        "w2": jnp.asarray(params["w2"], jnp.bfloat16),                # (400, 300)
        "b2": jnp.asarray(params["b2"], jnp.float32).reshape(1, -1),  # (1, 300)
        "w3": jnp.asarray(params["w3"], jnp.float32).reshape(1, -1),  # (1, 300)
        "b3": jnp.asarray(params["b3"], jnp.float32).reshape(1, 1),   # (1, 1)
    }


def critic_reference(state, action, params):
    x = jnp.concatenate([state, action], axis=1)
    h1 = jnp.maximum(x @ params["w1"] + params["b1"], 0.0)
    h2 = jnp.maximum(h1 @ params["w2"] + params["b2"], 0.0)
    return h2 @ params["w3"] + params["b3"]


if __name__ == "__main__":
    STATE_DIM, ACTION_DIM, BATCH = 16, 8, 2

    key = jax.random.PRNGKey(0)
    k_s, k_a, k_p = jax.random.split(key, 3)
    state = jax.random.normal(k_s, (BATCH, STATE_DIM), jnp.float32)
    action = jax.random.normal(k_a, (BATCH, ACTION_DIM), jnp.float32)
    params = init_critic_params(k_p, STATE_DIM, ACTION_DIM)
    prep = prepare_critic_params(params)

    q = critic_forward(state, action, prep)
    jax.block_until_ready(q)

    q_ref = critic_reference(state, action, params)
    assert q.shape == (BATCH, 1), q.shape
    # Matmul operands are bf16 (f32 accumulate); tolerance sized to bf16
    # quantization error through two matmuls, tighter than before so real
    # regressions are not hidden.
    assert jnp.allclose(q, q_ref, atol=2e-2, rtol=2e-2), (q, q_ref)

    print("KERNEL_OK")
</pallas_src>

<mosaic_0001>
module attributes {stable_mosaic.version = 11 : i64} {
  func.func @_critic_kernel(%arg0: i32, %arg1: memref<8x24xbf16, #tpu.memory_space<vmem>>, %arg2: memref<24x400xbf16, #tpu.memory_space<vmem>>, %arg3: memref<1x400xf32, #tpu.memory_space<vmem>>, %arg4: memref<400x300xbf16, #tpu.memory_space<vmem>>, %arg5: memref<1x300xf32, #tpu.memory_space<vmem>>, %arg6: memref<1x300xf32, #tpu.memory_space<vmem>>, %arg7: memref<1x1xf32, #tpu.memory_space<vmem>>, %arg8: memref<8x1xf32, #tpu.memory_space<vmem>>) attributes {dimension_semantics = [#tpu.dimension_semantics<parallel>], iteration_bounds = array<i64: 1>, scalar_prefetch = 0 : i64, scratch_operands = 0 : i64, tpu.core_type = #tpu.core_type<tc>, window_params = [{transform_indices = @transform_0, window_bounds = array<i64: 8, 24>}, {pipeline_mode = #tpu.pipeline_mode<synchronous>, transform_indices = @transform_1, window_bounds = array<i64: 24, 400>}, {pipeline_mode = #tpu.pipeline_mode<synchronous>, transform_indices = @transform_2, window_bounds = array<i64: 1, 400>}, {pipeline_mode = #tpu.pipeline_mode<synchronous>, transform_indices = @transform_3, window_bounds = array<i64: 400, 300>}, {pipeline_mode = #tpu.pipeline_mode<synchronous>, transform_indices = @transform_4, window_bounds = array<i64: 1, 300>}, {pipeline_mode = #tpu.pipeline_mode<synchronous>, transform_indices = @transform_5, window_bounds = array<i64: 1, 300>}, {pipeline_mode = #tpu.pipeline_mode<synchronous>, transform_indices = @transform_6, window_bounds = array<i64: 1, 1>}, {transform_indices = @transform_7, window_bounds = array<i64: 8, 1>}]} {
    %c0 = arith.constant 0 : index
    %c0_0 = arith.constant 0 : index
    %0 = vector.load %arg1[%c0, %c0_0] : memref<8x24xbf16, #tpu.memory_space<vmem>>, vector<8x24xbf16>
    %c0_1 = arith.constant 0 : index
    %c0_2 = arith.constant 0 : index
    %1 = vector.load %arg2[%c0_1, %c0_2] : memref<24x400xbf16, #tpu.memory_space<vmem>>, vector<24x400xbf16>
    %cst = arith.constant dense<0.000000e+00> : vector<8x400xf32>
    %2 = tpu.matmul %0, %1, %cst {dimension_numbers = #tpu.dot_dimension_numbers<[1], [0], [0], [1], [0, 0, 1, 1], [], []>} : vector<8x24xbf16>, vector<24x400xbf16>, vector<8x400xf32> -> vector<8x400xf32>
    %c0_3 = arith.constant 0 : index
    %c0_4 = arith.constant 0 : index
    %3 = vector.load %arg3[%c0_3, %c0_4] : memref<1x400xf32, #tpu.memory_space<vmem>>, vector<1x400xf32>
    %4 = vector.broadcast %3 : vector<1x400xf32> to vector<8x400xf32>
    %5 = arith.addf %2, %4 : vector<8x400xf32>
    %cst_5 = arith.constant 0.000000e+00 : f32
    %6 = vector.broadcast %cst_5 : f32 to vector<8x400xf32>
    %7 = arith.maximumf %5, %6 : vector<8x400xf32>
    %8 = arith.truncf %7 : vector<8x400xf32> to vector<8x400xbf16>
    %c0_6 = arith.constant 0 : index
    %c0_7 = arith.constant 0 : index
    %9 = vector.load %arg4[%c0_6, %c0_7] : memref<400x300xbf16, #tpu.memory_space<vmem>>, vector<400x300xbf16>
    %cst_8 = arith.constant dense<0.000000e+00> : vector<8x300xf32>
    %10 = tpu.matmul %8, %9, %cst_8 {dimension_numbers = #tpu.dot_dimension_numbers<[1], [0], [0], [1], [0, 0, 1, 1], [], []>} : vector<8x400xbf16>, vector<400x300xbf16>, vector<8x300xf32> -> vector<8x300xf32>
    %c0_9 = arith.constant 0 : index
    %c0_10 = arith.constant 0 : index
    %11 = vector.load %arg5[%c0_9, %c0_10] : memref<1x300xf32, #tpu.memory_space<vmem>>, vector<1x300xf32>
    %12 = vector.broadcast %11 : vector<1x300xf32> to vector<8x300xf32>
    %13 = arith.addf %10, %12 : vector<8x300xf32>
    %cst_11 = arith.constant 0.000000e+00 : f32
    %14 = vector.broadcast %cst_11 : f32 to vector<8x300xf32>
    %15 = arith.maximumf %13, %14 : vector<8x300xf32>
    %c0_12 = arith.constant 0 : index
    %c0_13 = arith.constant 0 : index
    %16 = vector.load %arg6[%c0_12, %c0_13] : memref<1x300xf32, #tpu.memory_space<vmem>>, vector<1x300xf32>
    %17 = vector.broadcast %16 : vector<1x300xf32> to vector<8x300xf32>
    %18 = arith.mulf %15, %17 : vector<8x300xf32>
    %cst_14 = arith.constant dense<0.000000e+00> : vector<8xf32>
    %19 = vector.multi_reduction <add>, %18, %cst_14 [1] : vector<8x300xf32> to vector<8xf32>
    %20 = vector.shape_cast %19 : vector<8xf32> to vector<8x1xf32>
    %c0_15 = arith.constant 0 : index
    %c0_16 = arith.constant 0 : index
    %21 = vector.load %arg7[%c0_15, %c0_16] : memref<1x1xf32, #tpu.memory_space<vmem>>, vector<1x1xf32>
    %22 = vector.broadcast %21 : vector<1x1xf32> to vector<8x1xf32>
    %23 = arith.addf %20, %22 : vector<8x1xf32>
    %c0_17 = arith.constant 0 : index
    %c0_18 = arith.constant 0 : index
    %24 = vector.load %arg8[%c0_17, %c0_18] : memref<8x1xf32, #tpu.memory_space<vmem>>, vector<8x1xf32>
    tpu.vector_store %arg8[%c0_17, %c0_18], %23 {strides = array<i32>} : memref<8x1xf32, #tpu.memory_space<vmem>>, vector<8x1xf32>,
    return
  }
  func.func @transform_0(%arg0: i32) -> (i32, i32) {
    %c0_i32 = arith.constant 0 : i32
    %c0_i32_0 = arith.constant 0 : i32
    return %arg0, %c0_i32 : i32, i32
  }
  func.func @transform_1(%arg0: i32) -> (i32, i32) {
    %c0_i32 = arith.constant 0 : i32
    %c0_i32_0 = arith.constant 0 : i32
    %c0_i32_1 = arith.constant 0 : i32
    return %c0_i32, %c0_i32_0 : i32, i32
  }
  func.func @transform_2(%arg0: i32) -> (i32, i32) {
    %c0_i32 = arith.constant 0 : i32
    %c0_i32_0 = arith.constant 0 : i32
    %c0_i32_1 = arith.constant 0 : i32
    return %c0_i32, %c0_i32_0 : i32, i32
  }
  func.func @transform_3(%arg0: i32) -> (i32, i32) {
    %c0_i32 = arith.constant 0 : i32
    %c0_i32_0 = arith.constant 0 : i32
    %c0_i32_1 = arith.constant 0 : i32
    return %c0_i32, %c0_i32_0 : i32, i32
  }
  func.func @transform_4(%arg0: i32) -> (i32, i32) {
    %c0_i32 = arith.constant 0 : i32
    %c0_i32_0 = arith.constant 0 : i32
    %c0_i32_1 = arith.constant 0 : i32
    return %c0_i32, %c0_i32_0 : i32, i32
  }
  func.func @transform_5(%arg0: i32) -> (i32, i32) {
    %c0_i32 = arith.constant 0 : i32
    %c0_i32_0 = arith.constant 0 : i32
    %c0_i32_1 = arith.constant 0 : i32
    return %c0_i32, %c0_i32_0 : i32, i32
  }
  func.func @transform_6(%arg0: i32) -> (i32, i32) {
    %c0_i32 = arith.constant 0 : i32
    %c0_i32_0 = arith.constant 0 : i32
    %c0_i32_1 = arith.constant 0 : i32
    return %c0_i32, %c0_i32_0 : i32, i32
  }
  func.func @transform_7(%arg0: i32) -> (i32, i32) {
    %c0_i32 = arith.constant 0 : i32
    %c0_i32_0 = arith.constant 0 : i32
    return %arg0, %c0_i32 : i32, i32
  }
}

</mosaic_0001>

<llo_original>
// kernel: critic_forward.1
$region0: #{critic_forward.1}
  #allocation0 [shape = 'u32[]', space=smem, size = 0x4, offset = 0x4, fixed_abs, tag = 'smem constant byte address 0x4 - core index']
  #allocation1 [shape = 'u32[72,128]{1,0:T(1,128)}', space=vmem, size = 0x9000, scoped, tag = 'internal scratch']
  #allocation2 [shape = 'f32[1,1]{1,0:T(1,128)S(1)}', space=vmem, size = 0x200, scoped, tag = 'scoped memory for critic_forward.1']
  %s0 = inlined_call_operand.vmem [shape: bf16[8,24], index: 0, kind: input, shape index: {}]
  %s1 = inlined_call_operand.hbm [shape: bf16[24,400], index: 1, kind: input, shape index: {}]
  %s2 = inlined_call_operand.vmem [shape: f32[1,400], index: 2, kind: input, shape index: {}]
  %s3 = inlined_call_operand.hbm [shape: bf16[400,300], index: 3, kind: input, shape index: {}]
  %s4 = inlined_call_operand.vmem [shape: f32[1,300], index: 4, kind: input, shape index: {}]
  %s5 = inlined_call_operand.vmem [shape: f32[1,300], index: 5, kind: input, shape index: {}]
  %s6 = inlined_call_operand.<no memory space> [shape: f32[1,1], index: 6, kind: input, shape index: {}]
  %s7 = inlined_call_operand.vmem [shape: f32[8,1], index: 7, kind: output, shape index: {}]
  %s8 = sld [smem:[#allocation0]]
  $region46: #{critic_forward.1} parent=0
    _
  %s10 = ssub.s32 1, %s8
  %s11 = scalar_select 0, %s10, %s8
  %v12 = vstv %s6
  %13 = vst [vmem:[#allocation2] sm:$0x1] %v12
  $region1: #{critic_forward.1} parent=0
    #allocation3 [shape = 'u8[24576]{0}', space=vmem, size = 0x6000, scoped, tag = 'input window, operand 1, single buffered']
    #allocation4 [shape = 's32[1]{0}', space=sflag, size = 0x4, scoped, tag = 'scoped memory for critic_forward.1']
    #allocation5 [shape = 'u8[307200]{0}', space=vmem, size = 0x4b000, scoped, tag = 'input window, operand 3, single buffered']
    #allocation6 [shape = 's32[1]{0}', space=sflag, size = 0x4, scoped, tag = 'scoped memory for critic_forward.1']
    %14 = vsyncpa [#allocation4], 0
    %15 = vsyncpa [#allocation6], 0
    // Predicated region
    $region2: #{critic_forward.1} parent=1 // pred_check
      _
    $region3: #{critic_forward.1} parent=1 // pred_check_branch
      %17 = sbr.rel (0) target = $region5
    $region4: #{critic_forward.1} parent=1 // pred_region
      _
    $region5: #{critic_forward.1} parent=1 // pred_fallthru
      _
    // Predicated region
    $region6: #{critic_forward.1} parent=1 // pred_check
      _
    $region7: #{critic_forward.1} parent=1 // pred_check_branch
      %19 = sbr.rel (0) target = $region9
    $region8: #{critic_forward.1} parent=1 // pred_region
      %21 = vsyncadd [#allocation4], 0
      %s22 = sshll.u32 %s1, 4
      %s23 = int_to_ptr.hbm [resolvable:$true] %s22
      %s24 = sshll.u32 [#allocation3], 4
      %s25 = int_to_ptr.vmem [resolvable:$true] %s24
      %30 = dma.hbm_to_vmem [thread:$0]  %s23, 768, %s25, [#allocation4], 256, 256, 16
    $region9: #{critic_forward.1} parent=1 // pred_fallthru
      _
    // Predicated region
    $region10: #{critic_forward.1} parent=1 // pred_check
      _
    $region11: #{critic_forward.1} parent=1 // pred_check_branch
      %32 = sbr.rel (0) target = $region13
    $region12: #{critic_forward.1} parent=1 // pred_region
      _
    $region13: #{critic_forward.1} parent=1 // pred_fallthru
      _
    // Predicated region
    $region14: #{critic_forward.1} parent=1 // pred_check
      _
    $region15: #{critic_forward.1} parent=1 // pred_check_branch
      %34 = sbr.rel (0) target = $region17
    $region16: #{critic_forward.1} parent=1 // pred_region
      %36 = vsyncadd [#allocation6], 0
      %s37 = sshll.u32 %s3, 4
      %s38 = int_to_ptr.hbm [resolvable:$true] %s37
      %s39 = sshll.u32 [#allocation5], 4
      %s40 = int_to_ptr.vmem [resolvable:$true] %s39
      %45 = dma.hbm_to_vmem [thread:$0]  %s38, 9600, %s40, [#allocation6], 192, 192, 12
    $region17: #{critic_forward.1} parent=1 // pred_fallthru
      _
    // Predicated region
    $region18: #{critic_forward.1} parent=1 // pred_check
      _
    $region19: #{critic_forward.1} parent=1 // pred_check_branch
      %47 = sbr.rel (0) target = $region21
    $region20: #{critic_forward.1} parent=1 // pred_region
      _
    $region21: #{critic_forward.1} parent=1 // pred_fallthru
      _
    // Predicated region
    $region22: #{critic_forward.1} parent=1 // pred_check
      _
    $region23: #{critic_forward.1} parent=1 // pred_check_branch
      %49 = sbr.rel (0) target = $region25
    $region24: #{critic_forward.1} parent=1 // pred_region
      _
    $region25: #{critic_forward.1} parent=1 // pred_fallthru
      _
    // Predicated region
    $region26: #{critic_forward.1} parent=1 // pred_check
      _
    $region27: #{critic_forward.1} parent=1 // pred_check_branch
      %51 = sbr.rel (0) target = $region29
    $region28: #{critic_forward.1} parent=1 // pred_region
      _
    $region29: #{critic_forward.1} parent=1 // pred_fallthru
      _
    // Predicated region
    $region30: #{critic_forward.1} parent=1 // pred_check
      _
    $region31: #{critic_forward.1} parent=1 // pred_check_branch
      %53 = sbr.rel (0) target = $region33
    $region32: #{critic_forward.1} parent=1 // pred_region
      %55 = dma.done [#allocation4], 768
    $region33: #{critic_forward.1} parent=1 // pred_fallthru
      _
    // Predicated region
    $region34: #{critic_forward.1} parent=1 // pred_check
      _
    $region35: #{critic_forward.1} parent=1 // pred_check_branch
      %57 = sbr.rel (0) target = $region37
    $region36: #{critic_forward.1} parent=1 // pred_region
      %59 = dma.done [#allocation6], 9600
    $region37: #{critic_forward.1} parent=1 // pred_fallthru
      _
    %v61 = vld [vmem:[%s0] sm:$0xf]
    %v62 = vld [vmem:[#allocation3] sm:$0xff]
    %v63 = vld [vmem:[#allocation3 + $0x8] sm:$0xff]
    %v64 = vld [vmem:[#allocation3 + $0x10] sm:$0xff]
    %v65 = vld [vmem:[#allocation3 + $0x18] sm:$0xff]
    %v66 = vld [vmem:[#allocation3 + $0x20] sm:$0xff]
    %v67 = vld [vmem:[#allocation3 + $0x28] sm:$0xff]
    %v68 = vld [vmem:[%s2] sm:$0xf]
    %v70 = vperm.slane %v68, 0
    %v71 = vperm.slane %v68, 1
    %v72 = vperm.slane %v68, 2
    %v73 = vperm.slane %v68, 3
    %v84 = vunpack.c.l.b16 %v62
    %v85 = vunpack.c.h.b16 %v62
    %v86 = vunpack.c.l.b16 %v63
    %v87 = vunpack.c.h.b16 %v63
    %v88 = vunpack.c.l.b16 %v64
    %v89 = vunpack.c.h.b16 %v64
    %v90 = vunpack.c.l.b16 %v65
    %v91 = vunpack.c.h.b16 %v65
    %v92 = vunpack.c.l.b16 %v66
    %v93 = vunpack.c.h.b16 %v66
    %v94 = vunpack.c.l.b16 %v67
    %v95 = vunpack.c.h.b16 %v67
    %v96 = vpack.c.b16 %v88, %v84
    %v97 = vpack.c.b16 %v89, %v85
    %v98 = vpack.c.b16 %v90, %v86
    %v99 = vpack.c.b16 %v91, %v87
    %v100 = vpack.c.b16 %v92, %v92
    %v101 = vpack.c.b16 %v93, %v93
    %v102 = vpack.c.b16 %v94, %v94
    %v103 = vpack.c.b16 %v95, %v95
    %vm108 = vcmask 195584
    %v110 = vsel %vm108, %v61, 0
    %vm112 = vcmask 1043456
    %v114 = vsel %vm112, %v100, 0
    %v117 = vsel %vm112, %v101, 0
    %v120 = vsel %vm112, %v102, 0
    %v123 = vsel %vm112, %v103, 0
    %125 = vmatpush.bf16.msra.mxu0 0
    %126 = vmatpush.bf16.msra.mxu0 0
    %127 = vmatpush.bf16.msra.mxu0 0
    %128 = vmatpush.bf16.msra.mxu0 0
    %129 = vmatpush.bf16.msra.mxu0 0
    %130 = vmatpush.bf16.msra.mxu0 0
    %131 = vmatpush.bf16.msra.mxu0 %v114
    %132 = vmatpush.bf16.msra.mxu0 %v96
    %133 = vmatmul.bf16.gmra.mxu0 %v110
    %v134 = vpop.f32.mrf.mxu0
    %v135 = vadd.f32 %v70, %v134
    %v136 = vpop.f32.mrf.mxu0
    %137 = vdwg.mxu0
    %138 = vmatpush.bf16.msra.mxu0 0
    %139 = vmatpush.bf16.msra.mxu0 0
    %140 = vmatpush.bf16.msra.mxu0 0
    %141 = vmatpush.bf16.msra.mxu0 0
    %142 = vmatpush.bf16.msra.mxu0 0
    %143 = vmatpush.bf16.msra.mxu0 0
    %144 = vmatpush.bf16.msra.mxu0 %v117
    %145 = vmatpush.bf16.msra.mxu0 %v97
    %146 = vmatmul.bf16.gmra.mxu0 %v110
    %v147 = vpop.f32.mrf.mxu0
    %v148 = vadd.f32 %v71, %v147
    %v149 = vpop.f32.mrf.mxu0
    %150 = vdwg.mxu0
    %151 = vmatpush.bf16.msra.mxu0 0
    %152 = vmatpush.bf16.msra.mxu0 0
    %153 = vmatpush.bf16.msra.mxu0 0
    %154 = vmatpush.bf16.msra.mxu0 0
    %155 = vmatpush.bf16.msra.mxu0 0
    %156 = vmatpush.bf16.msra.mxu0 0
    %157 = vmatpush.bf16.msra.mxu0 %v120
    %158 = vmatpush.bf16.msra.mxu0 %v98
    %159 = vmatmul.bf16.gmra.mxu0 %v110
    %v160 = vpop.f32.mrf.mxu0
    %v161 = vadd.f32 %v72, %v160
    %v162 = vpop.f32.mrf.mxu0
    %163 = vdwg.mxu0
    %164 = vmatpush.bf16.msra.mxu0 0
    %165 = vmatpush.bf16.msra.mxu0 0
    %166 = vmatpush.bf16.msra.mxu0 0
    %167 = vmatpush.bf16.msra.mxu0 0
    %168 = vmatpush.bf16.msra.mxu0 0
    %169 = vmatpush.bf16.msra.mxu0 0
    %170 = vmatpush.bf16.msra.mxu0 %v123
    %171 = vmatpush.bf16.msra.mxu0 %v99
    %172 = vmatmul.bf16.gmra.mxu0 %v110
    %v173 = vpop.f32.mrf.mxu0
    %v174 = vadd.f32 %v73, %v173
    %v175 = vpop.f32.mrf.mxu0
    %176 = vdwg.mxu0
    %v177 = vmax.f32 %v135, 0.0
    %v178 = vmax.f32 %v148, 0.0
    %v179 = vmax.f32 %v161, 0.0
    %v180 = vmax.f32 %v174, 0.0
    %v181 = vpack.c.bf16 %v177, %v177
    %v182 = vpack.c.bf16 %v178, %v178
    %v183 = vpack.c.bf16 %v179, %v179
    %v184 = vpack.c.bf16 %v180, %v180
    %v185 = vld [vmem:[#allocation5] sm:$0xff]
    %v186 = vld [vmem:[#allocation5 + $0x8] sm:$0xf]
    %v187 = vld [vmem:[#allocation5 + $0xc] sm:$0xff]
    %v188 = vld [vmem:[#allocation5 + $0x14] sm:$0xf]
    %v189 = vld [vmem:[#allocation5 + $0x18] sm:$0xff]
    %v190 = vld [vmem:[#allocation5 + $0x20] sm:$0xf]
    %v191 = vld [vmem:[#allocation5 + $0x24] sm:$0xff]
    %v192 = vld [vmem:[#allocation5 + $0x2c] sm:$0xf]
    %v193 = vld [vmem:[#allocation5 + $0x30] sm:$0xff]
    %v194 = vld [vmem:[#allocation5 + $0x38] sm:$0xf]
    %v195 = vld [vmem:[#allocation5 + $0x3c] sm:$0xff]
    %v196 = vld [vmem:[#allocation5 + $0x44] sm:$0xf]
    %v197 = vld [vmem:[#allocation5 + $0x48] sm:$0xff]
    %v198 = vld [vmem:[#allocation5 + $0x50] sm:$0xf]
    %v199 = vld [vmem:[#allocation5 + $0x54] sm:$0xff]
    %v200 = vld [vmem:[#allocation5 + $0x5c] sm:$0xf]
    %v201 = vld [vmem:[#allocation5 + $0x60] sm:$0xff]
    %v202 = vld [vmem:[#allocation5 + $0x68] sm:$0xf]
    %v203 = vld [vmem:[#allocation5 + $0x6c] sm:$0xff]
    %v204 = vld [vmem:[#allocation5 + $0x74] sm:$0xf]
    %v205 = vld [vmem:[#allocation5 + $0x78] sm:$0xff]
    %v206 = vld [vmem:[#allocation5 + $0x80] sm:$0xf]
    %v207 = vld [vmem:[#allocation5 + $0x84] sm:$0xff]
    %v208 = vld [vmem:[#allocation5 + $0x8c] sm:$0xf]
    %v209 = vld [vmem:[#allocation5 + $0x90] sm:$0xff]
    %v210 = vld [vmem:[#allocation5 + $0x98] sm:$0xf]
    %v211 = vld [vmem:[#allocation5 + $0x9c] sm:$0xff]
    %v212 = vld [vmem:[#allocation5 + $0xa4] sm:$0xf]
    %v213 = vld [vmem:[#allocation5 + $0xa8] sm:$0xff]
    %v214 = vld [vmem:[#allocation5 + $0xb0] sm:$0xf]
    %v215 = vld [vmem:[#allocation5 + $0xb4] sm:$0xff]
    %v216 = vld [vmem:[#allocation5 + $0xbc] sm:$0xf]
    %v217 = vld [vmem:[#allocation5 + $0xc0] sm:$0xff]
    %v218 = vld [vmem:[#allocation5 + $0xc8] sm:$0xf]
    %v219 = vld [vmem:[#allocation5 + $0xcc] sm:$0xff]
    %v220 = vld [vmem:[#allocation5 + $0xd4] sm:$0xf]
    %v221 = vld [vmem:[#allocation5 + $0xd8] sm:$0xff]
    %v222 = vld [vmem:[#allocation5 + $0xe0] sm:$0xf]
    %v223 = vld [vmem:[#allocation5 + $0xe4] sm:$0xff]
    %v224 = vld [vmem:[#allocation5 + $0xec] sm:$0xf]
    %v225 = vld [vmem:[#allocation5 + $0xf0] sm:$0xff]
    %v226 = vld [vmem:[#allocation5 + $0xf8] sm:$0xf]
    %v227 = vld [vmem:[#allocation5 + $0xfc] sm:$0xff]
    %v228 = vld [vmem:[#allocation5 + $0x104] sm:$0xf]
    %v229 = vld [vmem:[#allocation5 + $0x108] sm:$0xff]
    %v230 = vld [vmem:[#allocation5 + $0x110] sm:$0xf]
    %v231 = vld [vmem:[#allocation5 + $0x114] sm:$0xff]
    %v232 = vld [vmem:[#allocation5 + $0x11c] sm:$0xf]
    %v233 = vld [vmem:[#allocation5 + $0x120] sm:$0xff]
    %v234 = vld [vmem:[#allocation5 + $0x128] sm:$0xf]
    %v235 = vld [vmem:[#allocation5 + $0x12c] sm:$0xff]
    %v236 = vld [vmem:[#allocation5 + $0x134] sm:$0xf]
    %v237 = vld [vmem:[#allocation5 + $0x138] sm:$0xff]
    %v238 = vld [vmem:[#allocation5 + $0x140] sm:$0xf]
    %v239 = vld [vmem:[#allocation5 + $0x144] sm:$0xff]
    %v240 = vld [vmem:[#allocation5 + $0x14c] sm:$0xf]
    %v241 = vld [vmem:[#allocation5 + $0x150] sm:$0xff]
    %v242 = vld [vmem:[#allocation5 + $0x158] sm:$0xf]
    %v243 = vld [vmem:[#allocation5 + $0x15c] sm:$0xff]
    %v244 = vld [vmem:[#allocation5 + $0x164] sm:$0xf]
    %v245 = vld [vmem:[#allocation5 + $0x168] sm:$0xff]
    %v246 = vld [vmem:[#allocation5 + $0x170] sm:$0xf]
    %v247 = vld [vmem:[#allocation5 + $0x174] sm:$0xff]
    %v248 = vld [vmem:[#allocation5 + $0x17c] sm:$0xf]
    %v249 = vld [vmem:[#allocation5 + $0x180] sm:$0xff]
    %v250 = vld [vmem:[#allocation5 + $0x188] sm:$0xf]
    %v251 = vld [vmem:[#allocation5 + $0x18c] sm:$0xff]
    %v252 = vld [vmem:[#allocation5 + $0x194] sm:$0xf]
    %v253 = vld [vmem:[#allocation5 + $0x198] sm:$0xff]
    %v254 = vld [vmem:[#allocation5 + $0x1a0] sm:$0xf]
    %v255 = vld [vmem:[#allocation5 + $0x1a4] sm:$0xff]
    %v256 = vld [vmem:[#allocation5 + $0x1ac] sm:$0xf]
    %v257 = vld [vmem:[#allocation5 + $0x1b0] sm:$0xff]
    %v258 = vld [vmem:[#allocation5 + $0x1b8] sm:$0xf]
    %v259 = vld [vmem:[#allocation5 + $0x1bc] sm:$0xff]
    %v260 = vld [vmem:[#allocation5 + $0x1c4] sm:$0xf]
    %v261 = vld [vmem:[#allocation5 + $0x1c8] sm:$0xff]
    %v262 = vld [vmem:[#allocation5 + $0x1d0] sm:$0xf]
    %v263 = vld [vmem:[#allocation5 + $0x1d4] sm:$0xff]
    %v264 = vld [vmem:[#allocation5 + $0x1dc] sm:$0xf]
    %v265 = vld [vmem:[#allocation5 + $0x1e0] sm:$0xff]
    %v266 = vld [vmem:[#allocation5 + $0x1e8] sm:$0xf]
    %v267 = vld [vmem:[#allocation5 + $0x1ec] sm:$0xff]
    %v268 = vld [vmem:[#allocation5 + $0x1f4] sm:$0xf]
    %v269 = vld [vmem:[#allocation5 + $0x1f8] sm:$0xff]
    %v270 = vld [vmem:[#allocation5 + $0x200] sm:$0xf]
    %v271 = vld [vmem:[#allocation5 + $0x204] sm:$0xff]
    %v272 = vld [vmem:[#allocation5 + $0x20c] sm:$0xf]
    %v273 = vld [vmem:[#allocation5 + $0x210] sm:$0xff]
    %v274 = vld [vmem:[#allocation5 + $0x218] sm:$0xf]
    %v275 = vld [vmem:[#allocation5 + $0x21c] sm:$0xff]
    %v276 = vld [vmem:[#allocation5 + $0x224] sm:$0xf]
    %v277 = vld [vmem:[#allocation5 + $0x228] sm:$0xff]
    %v278 = vld [vmem:[#allocation5 + $0x230] sm:$0xf]
    %v279 = vld [vmem:[#allocation5 + $0x234] sm:$0xff]
    %v280 = vld [vmem:[#allocation5 + $0x23c] sm:$0xf]
    %v281 = vld [vmem:[#allocation5 + $0x240] sm:$0xff]
    %v282 = vld [vmem:[#allocation5 + $0x248] sm:$0xf]
    %v283 = vld [vmem:[#allocation5 + $0x24c] sm:$0xff]
    %v284 = vld [vmem:[#allocation5 + $0x254] sm:$0xf]
    %v285 = vld [vmem:[%s4] sm:$0x7]
    %v287 = vperm.slane %v285, 0
    %v288 = vperm.slane %v285, 1
    %v289 = vperm.slane %v285, 2
    %v393 = vunpack.c.l.b16 %v185
    %v394 = vunpack.c.h.b16 %v185
    %v395 = vunpack.c.l.b16 %v186
    %v396 = vunpack.c.l.b16 %v187
    %v397 = vunpack.c.h.b16 %v187
    %v398 = vunpack.c.l.b16 %v188
    %v399 = vunpack.c.l.b16 %v189
    %v400 = vunpack.c.h.b16 %v189
    %v401 = vunpack.c.l.b16 %v190
    %v402 = vunpack.c.l.b16 %v191
    %v403 = vunpack.c.h.b16 %v191
    %v404 = vunpack.c.l.b16 %v192
    %v405 = vunpack.c.l.b16 %v193
    %v406 = vunpack.c.h.b16 %v193
    %v407 = vunpack.c.l.b16 %v194
    %v408 = vunpack.c.l.b16 %v195
    %v409 = vunpack.c.h.b16 %v195
    %v410 = vunpack.c.l.b16 %v196
    %v411 = vunpack.c.l.b16 %v197
    %v412 = vunpack.c.h.b16 %v197
    %v413 = vunpack.c.l.b16 %v198
    %v414 = vunpack.c.l.b16 %v199
    %v415 = vunpack.c.h.b16 %v199
    %v416 = vunpack.c.l.b16 %v200
    %v417 = vunpack.c.l.b16 %v201
    %v418 = vunpack.c.h.b16 %v201
    %v419 = vunpack.c.l.b16 %v202
    %v420 = vunpack.c.l.b16 %v203
    %v421 = vunpack.c.h.b16 %v203
    %v422 = vunpack.c.l.b16 %v204
    %v423 = vunpack.c.l.b16 %v205
    %v424 = vunpack.c.h.b16 %v205
    %v425 = vunpack.c.l.b16 %v206
    %v426 = vunpack.c.l.b16 %v207
    %v427 = vunpack.c.h.b16 %v207
    %v428 = vunpack.c.l.b16 %v208
    %v429 = vunpack.c.l.b16 %v209
    %v430 = vunpack.c.h.b16 %v209
    %v431 = vunpack.c.l.b16 %v210
    %v432 = vunpack.c.l.b16 %v211
    %v433 = vunpack.c.h.b16 %v211
    %v434 = vunpack.c.l.b16 %v212
    %v435 = vunpack.c.l.b16 %v213
    %v436 = vunpack.c.h.b16 %v213
    %v437 = vunpack.c.l.b16 %v214
    %v438 = vunpack.c.l.b16 %v215
    %v439 = vunpack.c.h.b16 %v215
    %v440 = vunpack.c.l.b16 %v216
    %v441 = vunpack.c.l.b16 %v217
    %v442 = vunpack.c.h.b16 %v217
    %v443 = vunpack.c.l.b16 %v218
    %v444 = vunpack.c.l.b16 %v219
    %v445 = vunpack.c.h.b16 %v219
    %v446 = vunpack.c.l.b16 %v220
    %v447 = vunpack.c.l.b16 %v221
    %v448 = vunpack.c.h.b16 %v221
    %v449 = vunpack.c.l.b16 %v222
    %v450 = vunpack.c.l.b16 %v223
    %v451 = vunpack.c.h.b16 %v223
    %v452 = vunpack.c.l.b16 %v224
    %v453 = vunpack.c.l.b16 %v225
    %v454 = vunpack.c.h.b16 %v225
    %v455 = vunpack.c.l.b16 %v226
    %v456 = vunpack.c.l.b16 %v227
    %v457 = vunpack.c.h.b16 %v227
    %v458 = vunpack.c.l.b16 %v228
    %v459 = vunpack.c.l.b16 %v229
    %v460 = vunpack.c.h.b16 %v229
    %v461 = vunpack.c.l.b16 %v230
    %v462 = vunpack.c.l.b16 %v231
    %v463 = vunpack.c.h.b16 %v231
    %v464 = vunpack.c.l.b16 %v232
    %v465 = vunpack.c.l.b16 %v233
    %v466 = vunpack.c.h.b16 %v233
    %v467 = vunpack.c.l.b16 %v234
    %v468 = vunpack.c.l.b16 %v235
    %v469 = vunpack.c.h.b16 %v235
    %v470 = vunpack.c.l.b16 %v236
    %v471 = vunpack.c.l.b16 %v237
    %v472 = vunpack.c.h.b16 %v237
    %v473 = vunpack.c.l.b16 %v238
    %v474 = vunpack.c.l.b16 %v239
    %v475 = vunpack.c.h.b16 %v239
    %v476 = vunpack.c.l.b16 %v240
    %v477 = vunpack.c.l.b16 %v241
    %v478 = vunpack.c.h.b16 %v241
    %v479 = vunpack.c.l.b16 %v242
    %v480 = vunpack.c.l.b16 %v243
    %v481 = vunpack.c.h.b16 %v243
    %v482 = vunpack.c.l.b16 %v244
    %v483 = vunpack.c.l.b16 %v245
    %v484 = vunpack.c.h.b16 %v245
    %v485 = vunpack.c.l.b16 %v246
    %v486 = vunpack.c.l.b16 %v247
    %v487 = vunpack.c.h.b16 %v247
    %v488 = vunpack.c.l.b16 %v248
    %v489 = vunpack.c.l.b16 %v249
    %v490 = vunpack.c.h.b16 %v249
    %v491 = vunpack.c.l.b16 %v250
    %v492 = vunpack.c.l.b16 %v251
    %v493 = vunpack.c.h.b16 %v251
    %v494 = vunpack.c.l.b16 %v252
    %v495 = vunpack.c.l.b16 %v253
    %v496 = vunpack.c.h.b16 %v253
    %v497 = vunpack.c.l.b16 %v254
    %v498 = vunpack.c.l.b16 %v255
    %v499 = vunpack.c.h.b16 %v255
    %v500 = vunpack.c.l.b16 %v256
    %v501 = vunpack.c.l.b16 %v257
    %v502 = vunpack.c.h.b16 %v257
    %v503 = vunpack.c.l.b16 %v258
    %v504 = vunpack.c.l.b16 %v259
    %v505 = vunpack.c.h.b16 %v259
    %v506 = vunpack.c.l.b16 %v260
    %v507 = vunpack.c.l.b16 %v261
    %v508 = vunpack.c.h.b16 %v261
    %v509 = vunpack.c.l.b16 %v262
    %v510 = vunpack.c.l.b16 %v263
    %v511 = vunpack.c.h.b16 %v263
    %v512 = vunpack.c.l.b16 %v264
    %v513 = vunpack.c.l.b16 %v265
    %v514 = vunpack.c.h.b16 %v265
    %v515 = vunpack.c.l.b16 %v266
    %v516 = vunpack.c.l.b16 %v267
    %v517 = vunpack.c.h.b16 %v267
    %v518 = vunpack.c.l.b16 %v268
    %v519 = vunpack.c.l.b16 %v269
    %v520 = vunpack.c.h.b16 %v269
    %v521 = vunpack.c.l.b16 %v270
    %v522 = vunpack.c.l.b16 %v271
    %v523 = vunpack.c.h.b16 %v271
    %v524 = vunpack.c.l.b16 %v272
    %v525 = vunpack.c.l.b16 %v273
    %v526 = vunpack.c.h.b16 %v273
    %v527 = vunpack.c.l.b16 %v274
    %v528 = vunpack.c.l.b16 %v275
    %v529 = vunpack.c.h.b16 %v275
    %v530 = vunpack.c.l.b16 %v276
    %v531 = vunpack.c.l.b16 %v277
    %v532 = vunpack.c.h.b16 %v277
    %v533 = vunpack.c.l.b16 %v278
    %v534 = vunpack.c.l.b16 %v279
    %v535 = vunpack.c.h.b16 %v279
    %v536 = vunpack.c.l.b16 %v280
    %v537 = vunpack.c.l.b16 %v281
    %v538 = vunpack.c.h.b16 %v281
    %v539 = vunpack.c.l.b16 %v282
    %v540 = vunpack.c.l.b16 %v283
    %v541 = vunpack.c.h.b16 %v283
    %v542 = vunpack.c.l.b16 %v284
    %v543 = vpack.c.b16 %v396, %v393
    %v544 = vpack.c.b16 %v397, %v394
    %v545 = vpack.c.b16 %v398, %v395
    %v546 = vpack.c.b16 %v402, %v399
    %v547 = vpack.c.b16 %v403, %v400
    %v548 = vpack.c.b16 %v404, %v401
    %v549 = vpack.c.b16 %v408, %v405
    %v550 = vpack.c.b16 %v409, %v406
    %v551 = vpack.c.b16 %v410, %v407
    %v552 = vpack.c.b16 %v414, %v411
    %v553 = vpack.c.b16 %v415, %v412
    %v554 = vpack.c.b16 %v416, %v413
    %v555 = vpack.c.b16 %v420, %v417
    %v556 = vpack.c.b16 %v421, %v418
    %v557 = vpack.c.b16 %v422, %v419
    %v558 = vpack.c.b16 %v426, %v423
    %v559 = vpack.c.b16 %v427, %v424
    %v560 = vpack.c.b16 %v428, %v425
    %v561 = vpack.c.b16 %v432, %v429
    %v562 = vpack.c.b16 %v433, %v430
    %v563 = vpack.c.b16 %v434, %v431
    %v564 = vpack.c.b16 %v438, %v435
    %v565 = vpack.c.b16 %v439, %v436
    %v566 = vpack.c.b16 %v440, %v437
    %v567 = vpack.c.b16 %v444, %v441
    %v568 = vpack.c.b16 %v445, %v442
    %v569 = vpack.c.b16 %v446, %v443
    %v570 = vpack.c.b16 %v450, %v447
    %v571 = vpack.c.b16 %v451, %v448
    %v572 = vpack.c.b16 %v452, %v449
    %v573 = vpack.c.b16 %v456, %v453
    %v574 = vpack.c.b16 %v457, %v454
    %v575 = vpack.c.b16 %v458, %v455
    %v576 = vpack.c.b16 %v462, %v459
    %v577 = vpack.c.b16 %v463, %v460
    %v578 = vpack.c.b16 %v464, %v461
    %v579 = vpack.c.b16 %v468, %v465
    %v580 = vpack.c.b16 %v469, %v466
    %v581 = vpack.c.b16 %v470, %v467
    %v582 = vpack.c.b16 %v474, %v471
    %v583 = vpack.c.b16 %v475, %v472
    %v584 = vpack.c.b16 %v476, %v473
    %v585 = vpack.c.b16 %v480, %v477
    %v586 = vpack.c.b16 %v481, %v478
    %v587 = vpack.c.b16 %v482, %v479
    %v588 = vpack.c.b16 %v486, %v483
    %v589 = vpack.c.b16 %v487, %v484
    %v590 = vpack.c.b16 %v488, %v485
    %v591 = vpack.c.b16 %v492, %v489
    %v592 = vpack.c.b16 %v493, %v490
    %v593 = vpack.c.b16 %v494, %v491
    %v594 = vpack.c.b16 %v498, %v495
    %v595 = vpack.c.b16 %v499, %v496
    %v596 = vpack.c.b16 %v500, %v497
    %v597 = vpack.c.b16 %v504, %v501
    %v598 = vpack.c.b16 %v505, %v502
    %v599 = vpack.c.b16 %v506, %v503
    %v600 = vpack.c.b16 %v510, %v507
    %v601 = vpack.c.b16 %v511, %v508
    %v602 = vpack.c.b16 %v512, %v509
    %v603 = vpack.c.b16 %v516, %v513
    %v604 = vpack.c.b16 %v517, %v514
    %v605 = vpack.c.b16 %v518, %v515
    %v606 = vpack.c.b16 %v522, %v519
    %v607 = vpack.c.b16 %v523, %v520
    %v608 = vpack.c.b16 %v524, %v521
    %v609 = vpack.c.b16 %v528, %v525
    %v610 = vpack.c.b16 %v529, %v526
    %v611 = vpack.c.b16 %v530, %v527
    %v612 = vpack.c.b16 %v534, %v531
    %v613 = vpack.c.b16 %v535, %v532
    %v614 = vpack.c.b16 %v536, %v533
    %v615 = vpack.c.b16 %v540, %v537
    %v616 = vpack.c.b16 %v541, %v538
    %v617 = vpack.c.b16 %v542, %v539
    %vm693 = vcmask 130048
    %v695 = vsel %vm693, %v184, 0
    %697 = vmatpush.bf16.msra.mxu0 %v564
    %698 = vmatpush.bf16.msra.mxu0 %v561
    %699 = vmatpush.bf16.msra.mxu0 %v558
    %700 = vmatpush.bf16.msra.mxu0 %v555
    %701 = vmatpush.bf16.msra.mxu0 %v552
    %702 = vmatpush.bf16.msra.mxu0 %v549
    %703 = vmatpush.bf16.msra.mxu0 %v546
    %704 = vmatpush.bf16.msra.mxu0 %v543
    %705 = vmatmul.bf16.gmra.mxu0 %v181
    %v706 = vpop.f32.mrf.mxu0
    %v707 = vadd.f32 %v287, %v706
    %v708 = vpop.f32.mrf.mxu0
    %709 = vdwg.mxu0
    %710 = vmatpush.bf16.msra.mxu0 %v588
    %711 = vmatpush.bf16.msra.mxu0 %v585
    %712 = vmatpush.bf16.msra.mxu0 %v582
    %713 = vmatpush.bf16.msra.mxu0 %v579
    %714 = vmatpush.bf16.msra.mxu0 %v576
    %715 = vmatpush.bf16.msra.mxu0 %v573
    %716 = vmatpush.bf16.msra.mxu0 %v570
    %717 = vmatpush.bf16.msra.mxu0 %v567
    %718 = vmatmul.bf16.gmra.mxu0 %v182
    %v719 = vpop.f32.mrf.mxu0
    %v720 = vadd.f32 %v707, %v719
    %v721 = vpop.f32.mrf.mxu0
    %722 = vdwg.mxu0
    %723 = vmatpush.bf16.msra.mxu0 %v612
    %724 = vmatpush.bf16.msra.mxu0 %v609
    %725 = vmatpush.bf16.msra.mxu0 %v606
    %726 = vmatpush.bf16.msra.mxu0 %v603
    %727 = vmatpush.bf16.msra.mxu0 %v600
    %728 = vmatpush.bf16.msra.mxu0 %v597
    %729 = vmatpush.bf16.msra.mxu0 %v594
    %730 = vmatpush.bf16.msra.mxu0 %v591
    %731 = vmatmul.bf16.gmra.mxu0 %v183
    %v732 = vpop.f32.mrf.mxu0
    %v733 = vadd.f32 %v720, %v732
    %v734 = vpop.f32.mrf.mxu0
    %735 = vdwg.mxu0
    %736 = vmatpush.bf16.msra.mxu0 0
    %737 = vmatpush.bf16.msra.mxu0 0
    %738 = vmatpush.bf16.msra.mxu0 0
    %739 = vmatpush.bf16.msra.mxu0 0
    %740 = vmatpush.bf16.msra.mxu0 0
    %741 = vmatpush.bf16.msra.mxu0 0
    %742 = vmatpush.bf16.msra.mxu0 0
    %743 = vmatpush.bf16.msra.mxu0 %v615
    %744 = vmatmul.bf16.gmra.mxu0 %v695
    %v745 = vpop.f32.mrf.mxu0
    %v746 = vadd.f32 %v733, %v745
    %v747 = vpop.f32.mrf.mxu0
    %748 = vdwg.mxu0
    %749 = vmatpush.bf16.msra.mxu0 %v565
    %750 = vmatpush.bf16.msra.mxu0 %v562
    %751 = vmatpush.bf16.msra.mxu0 %v559
    %752 = vmatpush.bf16.msra.mxu0 %v556
    %753 = vmatpush.bf16.msra.mxu0 %v553
    %754 = vmatpush.bf16.msra.mxu0 %v550
    %755 = vmatpush.bf16.msra.mxu0 %v547
    %756 = vmatpush.bf16.msra.mxu0 %v544
    %757 = vmatmul.bf16.gmra.mxu0 %v181
    %v758 = vpop.f32.mrf.mxu0
    %v759 = vadd.f32 %v288, %v758
    %v760 = vpop.f32.mrf.mxu0
    %761 = vdwg.mxu0
    %762 = vmatpush.bf16.msra.mxu0 %v589
    %763 = vmatpush.bf16.msra.mxu0 %v586
    %764 = vmatpush.bf16.msra.mxu0 %v583
    %765 = vmatpush.bf16.msra.mxu0 %v580
    %766 = vmatpush.bf16.msra.mxu0 %v577
    %767 = vmatpush.bf16.msra.mxu0 %v574
    %768 = vmatpush.bf16.msra.mxu0 %v571
    %769 = vmatpush.bf16.msra.mxu0 %v568
    %770 = vmatmul.bf16.gmra.mxu0 %v182
    %v771 = vpop.f32.mrf.mxu0
    %v772 = vadd.f32 %v759, %v771
    %v773 = vpop.f32.mrf.mxu0
    %774 = vdwg.mxu0
    %775 = vmatpush.bf16.msra.mxu0 %v613
    %776 = vmatpush.bf16.msra.mxu0 %v610
    %777 = vmatpush.bf16.msra.mxu0 %v607
    %778 = vmatpush.bf16.msra.mxu0 %v604
    %779 = vmatpush.bf16.msra.mxu0 %v601
    %780 = vmatpush.bf16.msra.mxu0 %v598
    %781 = vmatpush.bf16.msra.mxu0 %v595
    %782 = vmatpush.bf16.msra.mxu0 %v592
    %783 = vmatmul.bf16.gmra.mxu0 %v183
    %v784 = vpop.f32.mrf.mxu0
    %v785 = vadd.f32 %v772, %v784
    %v786 = vpop.f32.mrf.mxu0
    %787 = vdwg.mxu0
    %788 = vmatpush.bf16.msra.mxu0 0
    %789 = vmatpush.bf16.msra.mxu0 0
    %790 = vmatpush.bf16.msra.mxu0 0
    %791 = vmatpush.bf16.msra.mxu0 0
    %792 = vmatpush.bf16.msra.mxu0 0
    %793 = vmatpush.bf16.msra.mxu0 0
    %794 = vmatpush.bf16.msra.mxu0 0
    %795 = vmatpush.bf16.msra.mxu0 %v616
    %796 = vmatmul.bf16.gmra.mxu0 %v695
    %v797 = vpop.f32.mrf.mxu0
    %v798 = vadd.f32 %v785, %v797
    %v799 = vpop.f32.mrf.mxu0
    %800 = vdwg.mxu0
    %801 = vmatpush.bf16.msra.mxu0 %v566
    %802 = vmatpush.bf16.msra.mxu0 %v563
    %803 = vmatpush.bf16.msra.mxu0 %v560
    %804 = vmatpush.bf16.msra.mxu0 %v557
    %805 = vmatpush.bf16.msra.mxu0 %v554
    %806 = vmatpush.bf16.msra.mxu0 %v551
    %807 = vmatpush.bf16.msra.mxu0 %v548
    %808 = vmatpush.bf16.msra.mxu0 %v545
    %809 = vmatmul.bf16.gmra.mxu0 %v181
    %v810 = vpop.f32.mrf.mxu0
    %v811 = vadd.f32 %v289, %v810
    %v812 = vpop.f32.mrf.mxu0
    %813 = vdwg.mxu0
    %814 = vmatpush.bf16.msra.mxu0 %v590
    %815 = vmatpush.bf16.msra.mxu0 %v587
    %816 = vmatpush.bf16.msra.mxu0 %v584
    %817 = vmatpush.bf16.msra.mxu0 %v581
    %818 = vmatpush.bf16.msra.mxu0 %v578
    %819 = vmatpush.bf16.msra.mxu0 %v575
    %820 = vmatpush.bf16.msra.mxu0 %v572
    %821 = vmatpush.bf16.msra.mxu0 %v569
    %822 = vmatmul.bf16.gmra.mxu0 %v182
    %v823 = vpop.f32.mrf.mxu0
    %v824 = vadd.f32 %v811, %v823
    %v825 = vpop.f32.mrf.mxu0
    %826 = vdwg.mxu0
    %827 = vmatpush.bf16.msra.mxu0 %v614
    %828 = vmatpush.bf16.msra.mxu0 %v611
    %829 = vmatpush.bf16.msra.mxu0 %v608
    %830 = vmatpush.bf16.msra.mxu0 %v605
    %831 = vmatpush.bf16.msra.mxu0 %v602
    %832 = vmatpush.bf16.msra.mxu0 %v599
    %833 = vmatpush.bf16.msra.mxu0 %v596
    %834 = vmatpush.bf16.msra.mxu0 %v593
    %835 = vmatmul.bf16.gmra.mxu0 %v183
    %v836 = vpop.f32.mrf.mxu0
    %v837 = vadd.f32 %v824, %v836
    %v838 = vpop.f32.mrf.mxu0
    %839 = vdwg.mxu0
    %840 = vmatpush.bf16.msra.mxu0 0
    %841 = vmatpush.bf16.msra.mxu0 0
    %842 = vmatpush.bf16.msra.mxu0 0
    %843 = vmatpush.bf16.msra.mxu0 0
    %844 = vmatpush.bf16.msra.mxu0 0
    %845 = vmatpush.bf16.msra.mxu0 0
    %846 = vmatpush.bf16.msra.mxu0 0
    %847 = vmatpush.bf16.msra.mxu0 %v617
    %848 = vmatmul.bf16.gmra.mxu0 %v695
    %v849 = vpop.f32.mrf.mxu0
    %v850 = vadd.f32 %v837, %v849
    %v851 = vpop.f32.mrf.mxu0
    %852 = vdwg.mxu0
    %v853 = vmax.f32 %v746, 0.0
    %v854 = vmax.f32 %v798, 0.0
    %v855 = vmax.f32 %v850, 0.0
    %v856 = vld [vmem:[%s5] sm:$0x7]
    %v858 = vperm.slane %v856, 0
    %v859 = vperm.slane %v856, 1
    %v860 = vperm.slane %v856, 2
    %v864 = vmul.f32 %v853, %v858
    %v865 = vmul.f32 %v854, %v859
    %v866 = vmul.f32 %v855, %v860
    %v867 = vadd.f32 %v864, %v865
    %vm868 = vcmask 359424
    %v869 = vsel %vm868, %v866, 0.0
    %v870 = vadd.f32 %v867, %v869
    %871 = vadd.xlane.f32.xlu0 %v870
    %v872 = vpop.xlane.xlu0 %871
    %v873 = vld [vmem:[#allocation2] sm:$0x1]
    %v875 = vperm.slane %v873, 0
    %v877 = vadd.f32 %v872, %v875
    %vm878 = vcmask 7168
    %879 = vst.msk [vmem:[%s7] sm:$0xff] %vm878, %v877
    // Predicated region
    $region38: #{critic_forward.1} parent=1 // pred_check
      _
    $region39: #{critic_forward.1} parent=1 // pred_check_branch
      %881 = sbr.rel (0) target = $region41
    $region40: #{critic_forward.1} parent=1 // pred_region
      _
    $region41: #{critic_forward.1} parent=1 // pred_fallthru
      _
    // Predicated region
    $region42: #{critic_forward.1} parent=1 // pred_check
      _
    $region43: #{critic_forward.1} parent=1 // pred_check_branch
      %883 = sbr.rel (0) target = $region45
    $region44: #{critic_forward.1} parent=1 // pred_region
      _
    $region45: #{critic_forward.1} parent=1 // pred_fallthru
      _
    %884 = vsyncpa [#allocation4], 1
    %885 = vsyncpa [#allocation6], 1

</llo_original>
